<compile_context>
chip_gen: v6e
topology: v6e:2x2x1
jax: 0.10.0
libtpu: 0.0.40
codegen_flags: <defaults>
</compile_context>

<pallas_src>
import jax
import jax.numpy as jnp
import numpy as np
from jax import lax
from jax.experimental import pallas as pl
from jax.experimental.pallas import tpu as pltpu


def _pick_tile_n(n, c, itemsize, vmem_budget=20 * 1024 * 1024, n_temporaries=10):
    """C-aware tile pick: lane-padded footprint of the double-buffered input blocks plus
    in-kernel (TN, C_pad) temporaries must fit comfortably under the scoped-VMEM budget."""
    c_pad = ((c + 127) // 128) * 128             # lane padding of the class axis in VMEM
    in_row = c_pad * itemsize + 128 * 4          # logits row + (lane-padded) target row
    tmp_row = n_temporaries * c_pad * 4          # f32/i32 elementwise temporaries per row
    per_row = 2 * in_row + tmp_row               # 2x: double-buffered input blocks
    tn = vmem_budget // per_row
    tn = max(8, min(int(tn), 8192))
    tn = (tn // 8) * 8                           # sublane multiple
    n_ceil = ((n + 7) // 8) * 8                  # never bigger than the (8-rounded) batch
    return min(tn, max(8, n_ceil))


def _make_kernel(n, tn, tiles_per_core):
    def kernel(logits_ref, tgt_ref, out_ref, ct_ref, cp_ref, ag_ref):
        c = pl.program_id(0)          # core-split axis ("parallel")
        i = pl.program_id(1)          # N-tile axis ("arbitrary": carries the accumulators)

        @pl.when(i == 0)
        def _():
            ct_ref[...] = jnp.zeros_like(ct_ref)
            cp_ref[...] = jnp.zeros_like(cp_ref)
            ag_ref[...] = jnp.zeros_like(ag_ref)

        x = logits_ref[...]                                   # (TN, C), native dtype
        tgt = tgt_ref[...]                                    # (TN, 1) int32
        tn_, nc = x.shape

        # argmax over the class (lane) axis on raw logits; first index wins on ties.
        xmax = jnp.max(x, axis=1, keepdims=True)              # (TN, 1)
        cls = lax.broadcasted_iota(jnp.int32, (tn_, nc), 1)   # (TN, C)
        preds = jnp.min(jnp.where(x == xmax, cls, nc),
                        axis=1, keepdims=True)                # (TN, 1)

        t_oh = cls == tgt                                     # (TN, C) target one-hot
        p_oh = cls == preds                                   # (TN, C) prediction one-hot
        agree = preds == tgt                                  # (TN, 1)

        def accumulate(t_oh_, p_oh_, agree_):
            ct_ref[...] += jnp.sum(t_oh_.astype(jnp.float32), axis=0, keepdims=True)
            cp_ref[...] += jnp.sum(p_oh_.astype(jnp.float32), axis=0, keepdims=True)
            ag_ref[...] += jnp.sum(agree_.astype(jnp.float32), axis=0, keepdims=True)

        g = c * tiles_per_core + i            # global (unclamped) tile index
        tile_end = (g + 1) * tn

        @pl.when(tile_end <= n)               # full interior tile: no mask needed
        def _():
            accumulate(t_oh, p_oh, agree)

        @pl.when(tile_end > n)                # ragged tail / fully-overhanging tile
        def _():
            row = lax.broadcasted_iota(jnp.int32, (tn_, 1), 0)
            valid = (g * tn + row) < n        # (TN, 1) row-validity mask
            accumulate(t_oh & valid, p_oh & valid, agree & valid)

        @pl.when(i == pl.num_programs(1) - 1)  # emit this core's partial counts
        def _():
            sel = lax.broadcasted_iota(jnp.int32, out_ref.shape, 1)       # (1, 3, C)
            out_ref[...] = jnp.where(
                sel == 0, ct_ref[...][None, :, :],
                jnp.where(sel == 1, cp_ref[...][None, :, :],
                          ag_ref[...][None, :, :]))

    return kernel


def basic_classification_metric(logits: jax.Array, targets: jax.Array, *, tile_n=None):
    """logits: (N, C) float (any dtype), targets: (N,) int -> dict(acc=f32, kappa=f32)."""
    n, c = logits.shape
    itemsize = jnp.dtype(logits.dtype).itemsize

    tn = _pick_tile_n(n, c, itemsize) if tile_n is None else max(8, (int(tile_n) // 8) * 8)
    total_tiles = pl.cdiv(n, tn)
    num_cores = 2 if total_tiles >= 2 else 1        # v7x dual-TC split; serializes on 1-TC chips
    tiles_per_core = pl.cdiv(total_tiles, num_cores)

    tgt2d = targets.astype(jnp.int32).reshape(n, 1)

    def in_map(cc, ii):
        # Clamp the second core's overhanging tile indices to a valid block; their rows are
        # fully masked off inside the kernel, so the (re-read) data is irrelevant.
        return (jnp.minimum(cc * tiles_per_core + ii, total_tiles - 1), 0)

    partial = pl.pallas_call(
        _make_kernel(n, tn, tiles_per_core),
        out_shape=jax.ShapeDtypeStruct((num_cores, 3, c), jnp.float32),
        grid=(num_cores, tiles_per_core),
        in_specs=[pl.BlockSpec((tn, c), in_map),
                  pl.BlockSpec((tn, 1), in_map)],
        out_specs=pl.BlockSpec((1, 3, c), lambda cc, ii: (cc, 0, 0)),
        scratch_shapes=[pltpu.VMEM((1, c), jnp.float32),    # per-class target counts
                        pltpu.VMEM((1, c), jnp.float32),    # per-class prediction counts
                        pltpu.VMEM((1, 1), jnp.float32)],   # agreement count
        compiler_params=pltpu.CompilerParams(
            dimension_semantics=("parallel", "arbitrary"),
            vmem_limit_bytes=32 * 1024 * 1024),
        cost_estimate=pl.CostEstimate(
            flops=8 * n * c, transcendentals=0,
            bytes_accessed=n * c * itemsize + n * 4 + num_cores * 3 * c * 4),
    )(logits, tgt2d)

    # Tiny finalize in plain JAX (also merges the per-core partials).
    tot = jnp.sum(partial, axis=0)                   # (3, C)
    ct, cp, agree = tot[0], tot[1], tot[2, 0]
    n_f = jnp.float32(n)
    p_o = agree / n_f                                # micro accuracy == observed agreement
    p_e = jnp.sum(ct * cp) / (n_f * n_f)             # expected agreement
    denom = 1.0 - p_e
    kappa = jnp.where(denom > 1e-12, (p_o - p_e) / denom, jnp.float32(0.0))
    return dict(acc=p_o, kappa=kappa)


def _reference(logits, targets):
    scores = jax.nn.softmax(logits.astype(jnp.float32), axis=1)
    preds = jnp.argmax(scores, axis=1)
    acc = jnp.mean((preds == targets).astype(jnp.float32))
    c = logits.shape[1]
    conf = (jax.nn.one_hot(targets, c).T @ jax.nn.one_hot(preds, c)).astype(jnp.float32)
    n = jnp.float32(logits.shape[0])
    p_o = jnp.trace(conf) / n
    p_e = jnp.sum(jnp.sum(conf, axis=1) * jnp.sum(conf, axis=0)) / (n * n)
    kappa = (p_o - p_e) / (1.0 - p_e)
    return dict(acc=acc, kappa=kappa)


if __name__ == "__main__":
    key = jax.random.PRNGKey(0)
    k1, k2, k3, k4, k5, k6 = jax.random.split(key, 6)

    # 1) small single-tile case
    n1, c1 = 16, 8
    logits1 = jax.random.normal(k1, (n1, c1), dtype=jnp.float32)
    targets1 = jax.random.randint(k2, (n1,), 0, c1, dtype=jnp.int32)
    out1 = basic_classification_metric(logits1, targets1)
    jax.block_until_ready(out1)
    ref1 = _reference(logits1, targets1)
    np.testing.assert_allclose(np.asarray(out1["acc"]), np.asarray(ref1["acc"]), rtol=1e-5, atol=1e-5)
    np.testing.assert_allclose(np.asarray(out1["kappa"]), np.asarray(ref1["kappa"]), rtol=1e-5, atol=1e-5)

    # 2) multi-tile: exercises dual-core split, ragged tail, and a fully-overhanging tile
    n2, c2 = 300, 5
    logits2 = jax.random.normal(k3, (n2, c2), dtype=jnp.float32)
    targets2 = jax.random.randint(k4, (n2,), 0, c2, dtype=jnp.int32)
    out2 = basic_classification_metric(logits2, targets2, tile_n=64)
    jax.block_until_ready(out2)
    ref2 = _reference(logits2, targets2)
    np.testing.assert_allclose(np.asarray(out2["acc"]), np.asarray(ref2["acc"]), rtol=1e-5, atol=1e-5)
    np.testing.assert_allclose(np.asarray(out2["kappa"]), np.asarray(ref2["kappa"]), rtol=1e-5, atol=1e-5)

    # 3) odd N (not a multiple of 8) with the auto tile picker (single partial block)
    n3, c3 = 37, 3
    logits3 = jax.random.normal(k5, (n3, c3), dtype=jnp.float32)
    targets3 = jax.random.randint(k6, (n3,), 0, c3, dtype=jnp.int32)
    out3 = basic_classification_metric(logits3, targets3)
    jax.block_until_ready(out3)
    ref3 = _reference(logits3, targets3)
    np.testing.assert_allclose(np.asarray(out3["acc"]), np.asarray(ref3["acc"]), rtol=1e-5, atol=1e-5)
    np.testing.assert_allclose(np.asarray(out3["kappa"]), np.asarray(ref3["kappa"]), rtol=1e-5, atol=1e-5)

    print("KERNEL_OK")
</pallas_src>

<mosaic_0001>
module attributes {stable_mosaic.version = 11 : i64} {
  func.func @kernel(%arg0: i32, %arg1: i32, %arg2: memref<16x8xf32, #tpu.memory_space<vmem>>, %arg3: memref<16x1xi32, #tpu.memory_space<vmem>>, %arg4: memref<1x3x8xf32, #tpu.memory_space<vmem>>, %arg5: memref<1x8xf32, #tpu.memory_space<vmem>>, %arg6: memref<1x8xf32, #tpu.memory_space<vmem>>, %arg7: memref<1x1xf32, #tpu.memory_space<vmem>>) attributes {dimension_semantics = [#tpu.dimension_semantics<parallel>, #tpu.dimension_semantics<arbitrary>], iteration_bounds = array<i64: 1, 1>, scalar_prefetch = 0 : i64, scratch_operands = 3 : i64, tpu.core_type = #tpu.core_type<tc>, window_params = [{transform_indices = @transform_0, window_bounds = array<i64: 16, 8>}, {transform_indices = @transform_1, window_bounds = array<i64: 16, 1>}, {transform_indices = @transform_2, window_bounds = array<i64: 1, 3, 8>}]} {
    %c0_i32 = arith.constant 0 : i32
    %0 = arith.cmpi eq, %arg1, %c0_i32 : i32
    %1 = arith.extui %0 : i1 to i32
    %c0_i32_0 = arith.constant 0 : i32
    %2 = arith.cmpi ne, %1, %c0_i32_0 : i32
    scf.if %2 {
      %cst_12 = arith.constant 0.000000e+00 : f32
      %32 = vector.broadcast %cst_12 : f32 to vector<1x8xf32>
      %c0_13 = arith.constant 0 : index
      %c0_14 = arith.constant 0 : index
      %33 = vector.load %arg5[%c0_13, %c0_14] : memref<1x8xf32, #tpu.memory_space<vmem>>, vector<1x8xf32>
      tpu.vector_store %arg5[%c0_13, %c0_14], %32 {strides = array<i32>} : memref<1x8xf32, #tpu.memory_space<vmem>>, vector<1x8xf32>,
      %cst_15 = arith.constant 0.000000e+00 : f32
      %34 = vector.broadcast %cst_15 : f32 to vector<1x8xf32>
      %c0_16 = arith.constant 0 : index
      %c0_17 = arith.constant 0 : index
      %35 = vector.load %arg6[%c0_16, %c0_17] : memref<1x8xf32, #tpu.memory_space<vmem>>, vector<1x8xf32>
      tpu.vector_store %arg6[%c0_16, %c0_17], %34 {strides = array<i32>} : memref<1x8xf32, #tpu.memory_space<vmem>>, vector<1x8xf32>,
      %cst_18 = arith.constant 0.000000e+00 : f32
      %36 = vector.broadcast %cst_18 : f32 to vector<1x1xf32>
      %c0_19 = arith.constant 0 : index
      %c0_20 = arith.constant 0 : index
      %37 = vector.load %arg7[%c0_19, %c0_20] : memref<1x1xf32, #tpu.memory_space<vmem>>, vector<1x1xf32>
      tpu.vector_store %arg7[%c0_19, %c0_20], %36 {strides = array<i32>} : memref<1x1xf32, #tpu.memory_space<vmem>>, vector<1x1xf32>,
    } else {
    }
    %c0 = arith.constant 0 : index
    %c0_1 = arith.constant 0 : index
    %3 = vector.load %arg2[%c0, %c0_1] : memref<16x8xf32, #tpu.memory_space<vmem>>, vector<16x8xf32>
    %c0_2 = arith.constant 0 : index
    %c0_3 = arith.constant 0 : index
    %4 = vector.load %arg3[%c0_2, %c0_3] : memref<16x1xi32, #tpu.memory_space<vmem>>, vector<16x1xi32>
    %cst = arith.constant dense<0xFF800000> : vector<16xf32>
    %5 = vector.multi_reduction <maximumf>, %3, %cst [1] : vector<16x8xf32> to vector<16xf32>
    %6 = vector.shape_cast %5 : vector<16xf32> to vector<16x1xf32>
    %7 = tpu.iota {dimensions = array<i32: 1>} : vector<16x8xi32>
    %8 = vector.broadcast %6 : vector<16x1xf32> to vector<16x8xf32>
    %9 = arith.cmpf oeq, %3, %8 : vector<16x8xf32>
    %c8_i32 = arith.constant 8 : i32
    %10 = vector.broadcast %c8_i32 : i32 to vector<16x8xi32>
    %11 = arith.select %9, %7, %10 : vector<16x8xi1>, vector<16x8xi32>
    %cst_4 = arith.constant dense<2147483647> : vector<16xi32>
    %12 = vector.multi_reduction <minsi>, %11, %cst_4 [1] : vector<16x8xi32> to vector<16xi32>
    %13 = vector.shape_cast %12 : vector<16xi32> to vector<16x1xi32>
    %14 = vector.broadcast %4 : vector<16x1xi32> to vector<16x8xi32>
    %15 = arith.cmpi eq, %7, %14 : vector<16x8xi32>
    %16 = vector.broadcast %13 : vector<16x1xi32> to vector<16x8xi32>
    %17 = arith.cmpi eq, %7, %16 : vector<16x8xi32>
    %18 = arith.cmpi eq, %13, %4 : vector<16x1xi32>
    %c1_i32 = arith.constant 1 : i32
    %19 = arith.muli %arg0, %c1_i32 : i32
    %20 = arith.addi %19, %arg1 : i32
    %c1_i32_5 = arith.constant 1 : i32
    %21 = arith.addi %20, %c1_i32_5 : i32
    %c16_i32 = arith.constant 16 : i32
    %22 = arith.muli %21, %c16_i32 : i32
    %c16_i32_6 = arith.constant 16 : i32
    %23 = arith.cmpi sle, %22, %c16_i32_6 : i32
    %24 = arith.extui %23 : i1 to i32
    %c0_i32_7 = arith.constant 0 : i32
    %25 = arith.cmpi ne, %24, %c0_i32_7 : i32
    scf.if %25 {
      %c0_12 = arith.constant 0 : index
      %c0_13 = arith.constant 0 : index
      %32 = vector.load %arg5[%c0_12, %c0_13] : memref<1x8xf32, #tpu.memory_space<vmem>>, vector<1x8xf32>
      %33 = arith.extui %15 : vector<16x8xi1> to vector<16x8xi32>
      %34 = arith.sitofp %33 : vector<16x8xi32> to vector<16x8xf32>
      %cst_14 = arith.constant dense<0.000000e+00> : vector<8xf32>
      %35 = vector.multi_reduction <add>, %34, %cst_14 [0] : vector<16x8xf32> to vector<8xf32>
      %36 = vector.shape_cast %35 : vector<8xf32> to vector<1x8xf32>
      %37 = arith.addf %32, %36 : vector<1x8xf32>
      %c0_15 = arith.constant 0 : index
      %c0_16 = arith.constant 0 : index
      %38 = vector.load %arg5[%c0_15, %c0_16] : memref<1x8xf32, #tpu.memory_space<vmem>>, vector<1x8xf32>
      tpu.vector_store %arg5[%c0_15, %c0_16], %37 {strides = array<i32>} : memref<1x8xf32, #tpu.memory_space<vmem>>, vector<1x8xf32>,
      %c0_17 = arith.constant 0 : index
      %c0_18 = arith.constant 0 : index
      %39 = vector.load %arg6[%c0_17, %c0_18] : memref<1x8xf32, #tpu.memory_space<vmem>>, vector<1x8xf32>
      %40 = arith.extui %17 : vector<16x8xi1> to vector<16x8xi32>
      %41 = arith.sitofp %40 : vector<16x8xi32> to vector<16x8xf32>
      %cst_19 = arith.constant dense<0.000000e+00> : vector<8xf32>
      %42 = vector.multi_reduction <add>, %41, %cst_19 [0] : vector<16x8xf32> to vector<8xf32>
      %43 = vector.shape_cast %42 : vector<8xf32> to vector<1x8xf32>
      %44 = arith.addf %39, %43 : vector<1x8xf32>
      %c0_20 = arith.constant 0 : index
      %c0_21 = arith.constant 0 : index
      %45 = vector.load %arg6[%c0_20, %c0_21] : memref<1x8xf32, #tpu.memory_space<vmem>>, vector<1x8xf32>
      tpu.vector_store %arg6[%c0_20, %c0_21], %44 {strides = array<i32>} : memref<1x8xf32, #tpu.memory_space<vmem>>, vector<1x8xf32>,
      %c0_22 = arith.constant 0 : index
      %c0_23 = arith.constant 0 : index
      %46 = vector.load %arg7[%c0_22, %c0_23] : memref<1x1xf32, #tpu.memory_space<vmem>>, vector<1x1xf32>
      %47 = arith.extui %18 : vector<16x1xi1> to vector<16x1xi32>
      %48 = arith.sitofp %47 : vector<16x1xi32> to vector<16x1xf32>
      %cst_24 = arith.constant dense<0.000000e+00> : vector<1xf32>
      %49 = vector.multi_reduction <add>, %48, %cst_24 [0] : vector<16x1xf32> to vector<1xf32>
      %50 = vector.shape_cast %49 : vector<1xf32> to vector<1x1xf32>
      %51 = arith.addf %46, %50 : vector<1x1xf32>
      %c0_25 = arith.constant 0 : index
      %c0_26 = arith.constant 0 : index
      %52 = vector.load %arg7[%c0_25, %c0_26] : memref<1x1xf32, #tpu.memory_space<vmem>>, vector<1x1xf32>
      tpu.vector_store %arg7[%c0_25, %c0_26], %51 {strides = array<i32>} : memref<1x1xf32, #tpu.memory_space<vmem>>, vector<1x1xf32>,
    } else {
    }
    %c16_i32_8 = arith.constant 16 : i32
    %26 = arith.cmpi sgt, %22, %c16_i32_8 : i32
    %27 = arith.extui %26 : i1 to i32
    %c0_i32_9 = arith.constant 0 : i32
    %28 = arith.cmpi ne, %27, %c0_i32_9 : i32
    scf.if %28 {
      %32 = tpu.iota {dimensions = array<i32: 0>} : vector<16x1xi32>
      %c16_i32_12 = arith.constant 16 : i32
      %33 = arith.muli %20, %c16_i32_12 : i32
      %34 = vector.broadcast %33 : i32 to vector<16x1xi32>
      %35 = arith.addi %34, %32 : vector<16x1xi32>
      %c16_i32_13 = arith.constant 16 : i32
      %36 = vector.broadcast %c16_i32_13 : i32 to vector<16x1xi32>
      %37 = arith.cmpi slt, %35, %36 : vector<16x1xi32>
      %38 = vector.broadcast %37 : vector<16x1xi1> to vector<16x8xi1>
      %39 = arith.andi %15, %38 : vector<16x8xi1>
      %40 = vector.broadcast %37 : vector<16x1xi1> to vector<16x8xi1>
      %41 = arith.andi %17, %40 : vector<16x8xi1>
      %42 = arith.andi %18, %37 : vector<16x1xi1>
      %c0_14 = arith.constant 0 : index
      %c0_15 = arith.constant 0 : index
      %43 = vector.load %arg5[%c0_14, %c0_15] : memref<1x8xf32, #tpu.memory_space<vmem>>, vector<1x8xf32>
      %44 = arith.extui %39 : vector<16x8xi1> to vector<16x8xi32>
      %45 = arith.sitofp %44 : vector<16x8xi32> to vector<16x8xf32>
      %cst_16 = arith.constant dense<0.000000e+00> : vector<8xf32>
      %46 = vector.multi_reduction <add>, %45, %cst_16 [0] : vector<16x8xf32> to vector<8xf32>
      %47 = vector.shape_cast %46 : vector<8xf32> to vector<1x8xf32>
      %48 = arith.addf %43, %47 : vector<1x8xf32>
      %c0_17 = arith.constant 0 : index
      %c0_18 = arith.constant 0 : index
      %49 = vector.load %arg5[%c0_17, %c0_18] : memref<1x8xf32, #tpu.memory_space<vmem>>, vector<1x8xf32>
      tpu.vector_store %arg5[%c0_17, %c0_18], %48 {strides = array<i32>} : memref<1x8xf32, #tpu.memory_space<vmem>>, vector<1x8xf32>,
      %c0_19 = arith.constant 0 : index
      %c0_20 = arith.constant 0 : index
      %50 = vector.load %arg6[%c0_19, %c0_20] : memref<1x8xf32, #tpu.memory_space<vmem>>, vector<1x8xf32>
      %51 = arith.extui %41 : vector<16x8xi1> to vector<16x8xi32>
      %52 = arith.sitofp %51 : vector<16x8xi32> to vector<16x8xf32>
      %cst_21 = arith.constant dense<0.000000e+00> : vector<8xf32>
      %53 = vector.multi_reduction <add>, %52, %cst_21 [0] : vector<16x8xf32> to vector<8xf32>
      %54 = vector.shape_cast %53 : vector<8xf32> to vector<1x8xf32>
      %55 = arith.addf %50, %54 : vector<1x8xf32>
      %c0_22 = arith.constant 0 : index
      %c0_23 = arith.constant 0 : index
      %56 = vector.load %arg6[%c0_22, %c0_23] : memref<1x8xf32, #tpu.memory_space<vmem>>, vector<1x8xf32>
      tpu.vector_store %arg6[%c0_22, %c0_23], %55 {strides = array<i32>} : memref<1x8xf32, #tpu.memory_space<vmem>>, vector<1x8xf32>,
      %c0_24 = arith.constant 0 : index
      %c0_25 = arith.constant 0 : index
      %57 = vector.load %arg7[%c0_24, %c0_25] : memref<1x1xf32, #tpu.memory_space<vmem>>, vector<1x1xf32>
      %58 = arith.extui %42 : vector<16x1xi1> to vector<16x1xi32>
      %59 = arith.sitofp %58 : vector<16x1xi32> to vector<16x1xf32>
      %cst_26 = arith.constant dense<0.000000e+00> : vector<1xf32>
      %60 = vector.multi_reduction <add>, %59, %cst_26 [0] : vector<16x1xf32> to vector<1xf32>
      %61 = vector.shape_cast %60 : vector<1xf32> to vector<1x1xf32>
      %62 = arith.addf %57, %61 : vector<1x1xf32>
      %c0_27 = arith.constant 0 : index
      %c0_28 = arith.constant 0 : index
      %63 = vector.load %arg7[%c0_27, %c0_28] : memref<1x1xf32, #tpu.memory_space<vmem>>, vector<1x1xf32>
      tpu.vector_store %arg7[%c0_27, %c0_28], %62 {strides = array<i32>} : memref<1x1xf32, #tpu.memory_space<vmem>>, vector<1x1xf32>,
    } else {
    }
    %c0_i32_10 = arith.constant 0 : i32
    %29 = arith.cmpi eq, %arg1, %c0_i32_10 : i32
    %30 = arith.extui %29 : i1 to i32
    %c0_i32_11 = arith.constant 0 : i32
    %31 = arith.cmpi ne, %30, %c0_i32_11 : i32
    scf.if %31 {
      %32 = tpu.iota {dimensions = array<i32: 1>} : vector<1x3x8xi32>
      %c0_i32_12 = arith.constant 0 : i32
      %33 = vector.broadcast %c0_i32_12 : i32 to vector<1x3x8xi32>
      %34 = arith.cmpi eq, %32, %33 : vector<1x3x8xi32>
      %c0_13 = arith.constant 0 : index
      %c0_14 = arith.constant 0 : index
      %35 = vector.load %arg5[%c0_13, %c0_14] : memref<1x8xf32, #tpu.memory_space<vmem>>, vector<1x8xf32>
      %36 = vector.shape_cast %35 : vector<1x8xf32> to vector<1x1x8xf32>
      %c1_i32_15 = arith.constant 1 : i32
      %37 = vector.broadcast %c1_i32_15 : i32 to vector<1x3x8xi32>
      %38 = arith.cmpi eq, %32, %37 : vector<1x3x8xi32>
      %c0_16 = arith.constant 0 : index
      %c0_17 = arith.constant 0 : index
      %39 = vector.load %arg6[%c0_16, %c0_17] : memref<1x8xf32, #tpu.memory_space<vmem>>, vector<1x8xf32>
      %40 = vector.shape_cast %39 : vector<1x8xf32> to vector<1x1x8xf32>
      %c0_18 = arith.constant 0 : index
      %c0_19 = arith.constant 0 : index
      %41 = vector.load %arg7[%c0_18, %c0_19] : memref<1x1xf32, #tpu.memory_space<vmem>>, vector<1x1xf32>
      %42 = vector.shape_cast %41 : vector<1x1xf32> to vector<1x1x1xf32>
      %43 = vector.shape_cast %40 : vector<1x1x8xf32> to vector<1x1x8xf32>
      %44 = vector.broadcast %43 : vector<1x1x8xf32> to vector<1x3x8xf32>
      %45 = vector.shape_cast %42 : vector<1x1x1xf32> to vector<1x1x1xf32>
      %46 = vector.broadcast %45 : vector<1x1x1xf32> to vector<1x3x8xf32>
      %47 = arith.select %38, %44, %46 : vector<1x3x8xi1>, vector<1x3x8xf32>
      %48 = vector.shape_cast %36 : vector<1x1x8xf32> to vector<1x1x8xf32>
      %49 = vector.broadcast %48 : vector<1x1x8xf32> to vector<1x3x8xf32>
      %50 = arith.select %34, %49, %47 : vector<1x3x8xi1>, vector<1x3x8xf32>
      %c0_20 = arith.constant 0 : index
      %c0_21 = arith.constant 0 : index
      %c0_22 = arith.constant 0 : index
      %51 = vector.load %arg4[%c0_20, %c0_21, %c0_22] : memref<1x3x8xf32, #tpu.memory_space<vmem>>, vector<1x3x8xf32>
      tpu.vector_store %arg4[%c0_20, %c0_21, %c0_22], %50 {strides = array<i32>} : memref<1x3x8xf32, #tpu.memory_space<vmem>>, vector<1x3x8xf32>,
    } else {
    }
    return
  }
  func.func @transform_0(%arg0: i32, %arg1: i32) -> (i32, i32) {
    %c1_i32 = arith.constant 1 : i32
    %0 = arith.muli %arg0, %c1_i32 : i32
    %1 = arith.addi %0, %arg1 : i32
    %c0_i32 = arith.constant 0 : i32
    %2 = arith.minsi %1, %c0_i32 : i32
    %c0_i32_0 = arith.constant 0 : i32
    %c0_i32_1 = arith.constant 0 : i32
    return %2, %c0_i32_0 : i32, i32
  }
  func.func @transform_1(%arg0: i32, %arg1: i32) -> (i32, i32) {
    %c1_i32 = arith.constant 1 : i32
    %0 = arith.muli %arg0, %c1_i32 : i32
    %1 = arith.addi %0, %arg1 : i32
    %c0_i32 = arith.constant 0 : i32
    %2 = arith.minsi %1, %c0_i32 : i32
    %c0_i32_0 = arith.constant 0 : i32
    %c0_i32_1 = arith.constant 0 : i32
    return %2, %c0_i32_0 : i32, i32
  }
  func.func @transform_2(%arg0: i32, %arg1: i32) -> (i32, i32, i32) {
    %c0_i32 = arith.constant 0 : i32
    %c0_i32_0 = arith.constant 0 : i32
    %c0_i32_1 = arith.constant 0 : i32
    return %arg0, %c0_i32, %c0_i32_0 : i32, i32, i32
  }
}

</mosaic_0001>

<llo_original>
// kernel: tpu_custom_call.1
$region0: #{tpu_custom_call.1}
  #allocation0 [shape = 'u32[]', space=smem, size = 0x4, offset = 0x4, fixed_abs, tag = 'smem constant byte address 0x4 - core index']
  #allocation1 [shape = 'u32[144,128]{1,0:T(1,128)}', space=vmem, size = 0x12000, scoped, tag = 'internal scratch']
  #allocation2 [shape = 'f32[1,8]{1,0:T(1,128)}', space=vmem, size = 0x200, scoped, tag = 'scratch operand']
  #allocation3 [shape = 'f32[1,8]{1,0:T(1,128)}', space=vmem, size = 0x200, scoped, tag = 'scratch operand']
  #allocation4 [shape = 'f32[1,1]{1,0:T(1,128)}', space=vmem, size = 0x200, scoped, tag = 'scratch operand']
  %s0 = inlined_call_operand.vmem [shape: f32[16,8], index: 0, kind: input, shape index: {}]
  %s1 = inlined_call_operand.vmem [shape: s32[16,1], index: 1, kind: input, shape index: {}]
  %s2 = inlined_call_operand.vmem [shape: f32[1,3,8], index: 2, kind: output, shape index: {}]
  %s3 = sld [smem:[#allocation0]]
  $region34: #{tpu_custom_call.1} parent=0
    _
  %s5 = ssub.s32 1, %s3
  %s6 = scalar_select 0, %s5, %s3
  // Predicated region
  $region2: #{tpu_custom_call.1} parent=0 // pred_check
    _
  $region3: #{tpu_custom_call.1} parent=0 // pred_check_branch
    %8 = sbr.rel (0) target = $region5
  $region4: #{tpu_custom_call.1} parent=0 // pred_region
    %s9 = sadd.s32 0, 0
    %p10 = scmp.lt.s32.totalorder %s9, 0
    %s11 = scalar_select %p10, %s9, 0
    %s12 = smul.u32 2, %s11
    %p13 = scmp.lt.s32.totalorder %s12, 1
    %s14 = scalar_select %p13, %s12, 1
    %s15 = smul.addr %s14, 8
    %s16 = scalar_lea.vmem %s0, %s15
    %s17 = sadd.s32 0, 0
    %p18 = scmp.lt.s32.totalorder %s17, 0
    %s19 = scalar_select %p18, %s17, 0
    %s20 = smul.u32 2, %s19
  $region5: #{tpu_custom_call.1} parent=0 // pred_fallthru
    _
  // Predicated region
  $region6: #{tpu_custom_call.1} parent=0 // pred_check
    _
  $region7: #{tpu_custom_call.1} parent=0 // pred_check_branch
    %22 = sbr.rel (0) target = $region9
  $region8: #{tpu_custom_call.1} parent=0 // pred_region
    %s23 = sadd.s32 0, 0
    %p24 = scmp.lt.s32.totalorder %s23, 0
    %s25 = scalar_select %p24, %s23, 0
    %s26 = smul.u32 2, %s25
    %p27 = scmp.lt.s32.totalorder %s26, 1
    %s28 = scalar_select %p27, %s26, 1
    %s29 = smul.addr %s28, 8
    %s30 = scalar_lea.vmem %s1, %s29
    %s31 = sadd.s32 0, 0
    %p32 = scmp.lt.s32.totalorder %s31, 0
    %s33 = scalar_select %p32, %s31, 0
    %s34 = smul.u32 2, %s33
  $region9: #{tpu_custom_call.1} parent=0 // pred_fallthru
    _
  %s35 = sadd.s32 0, 0
  %p36 = scmp.lt.s32.totalorder %s35, 0
  %s37 = scalar_select %p36, %s35, 0
  %s38 = smul.u32 2, %s37
  %p39 = scmp.lt.s32.totalorder %s38, 1
  %s40 = scalar_select %p39, %s38, 1
  %s41 = smul.addr %s40, 8
  %s42 = scalar_lea.vmem %s0, %s41
  %s43 = sadd.s32 0, 0
  %p44 = scmp.lt.s32.totalorder %s43, 0
  %s45 = scalar_select %p44, %s43, 0
  %s46 = smul.u32 2, %s45
  %p47 = scmp.lt.s32.totalorder %s46, 1
  %s48 = scalar_select %p47, %s46, 1
  %s49 = smul.addr %s48, 8
  %s50 = scalar_lea.vmem %s1, %s49
  %s51 = sadd.s32 0, 0
  %p52 = scmp.lt.s32.totalorder %s51, 0
  %s53 = scalar_select %p52, %s51, 0
  %s54 = smul.u32 2, %s53
  %p55 = scmp.lt.s32.totalorder %s54, 1
  %s56 = scalar_select %p55, %s54, 1
  %s57 = smul.addr %s56, 8
  %s58 = scalar_lea.vmem %s0, %s57
  %s59 = sadd.s32 0, 0
  %p60 = scmp.lt.s32.totalorder %s59, 0
  %s61 = scalar_select %p60, %s59, 0
  %s62 = smul.u32 2, %s61
  %s63 = sadd.s32 0, 0
  %p64 = scmp.lt.s32.totalorder %s63, 0
  %s65 = scalar_select %p64, %s63, 0
  %s66 = smul.u32 2, %s65
  %p67 = scmp.lt.s32.totalorder %s66, 1
  %s68 = scalar_select %p67, %s66, 1
  %s69 = smul.addr %s68, 8
  %s70 = scalar_lea.vmem %s1, %s69
  %s71 = sadd.s32 0, 0
  %p72 = scmp.lt.s32.totalorder %s71, 0
  %s73 = scalar_select %p72, %s71, 0
  %s74 = smul.u32 2, %s73
  %p75 = scmp.eq.s32.totalorder 0, 0
  // Predicated region
  $region10: #{tpu_custom_call.1} parent=0 // pred_check
    %p76 = pneg %p75
  $region11: #{tpu_custom_call.1} parent=0 // pred_check_branch
    %78 = sbr.rel (%p76) target = $region13
  $region12: #{tpu_custom_call.1} parent=0 // pred_region
    %vm79 = vcmask 57344
    %80 = vst.msk [vmem:[#allocation2] sm:$0x1] %vm79, 0.0
    %81 = vst.msk [vmem:[#allocation3] sm:$0x1] %vm79, 0.0
    %vm82 = vcmask 0
    %83 = vst.msk [vmem:[#allocation4] sm:$0x1] %vm82, 0.0
  $region13: #{tpu_custom_call.1} parent=0 // pred_fallthru
    _
  %v84 = vld [vmem:[%s58] sm:$0xff]
  %v85 = vld [vmem:[%s58 + $0x8] sm:$0xff]
  %v86 = vld [vmem:[%s70] sm:$0xff]
  %v87 = vld [vmem:[%s70 + $0x8] sm:$0xff]
  %vm88 = vcmask 64512
  %v89 = vsel %vm88, %v84, -inf
  %90 = vmax.xlane.f32.xlu0 %v89
  %v91 = vpop.xlane.xlu0 %90
  %v92 = vsel %vm88, %v85, -inf
  %93 = vmax.xlane.f32.xlu0 %v92
  %v94 = vpop.xlane.xlu0 %93
  %v95 = vlaneseq
  %v96 = vand.u32 %v95, 127
  %vm97 = vcmp.eq.f32.partialorder %v84, %v91
  %vm98 = vcmp.eq.f32.partialorder %v85, %v94
  %v99 = vsel %vm97, %v96, 8
  %v100 = vsel %vm98, %v96, 8
  %v101 = vsel %vm88, %v99, 2147483647
  %v102 = vand.u32 %v101, 65535
  %v103 = vshra.s32 %v101, 16
  %v104 = vcvt.s32.f32 %v102
  %v105 = vcvt.s32.f32 %v103
  %106 = vmin.xlane.f32.xlu0 %v105
  %v107 = vpop.xlane.xlu0 %106
  %vm108 = vcmp.eq.f32.partialorder %v105, %v107
  %v109 = vsel %vm108, %v104, inf
  %110 = vmin.xlane.f32.xlu0 %v109
  %v111 = vpop.xlane.xlu0 %110
  %v112 = vcvt.f32.s32 %v111
  %v113 = vcvt.f32.s32 %v107
  %v114 = vshll.u32 %v113, 16
  %v115 = vadd.s32 %v114, %v112
  %v116 = vsel %vm88, %v100, 2147483647
  %v117 = vand.u32 %v116, 65535
  %v118 = vshra.s32 %v116, 16
  %v119 = vcvt.s32.f32 %v117
  %v120 = vcvt.s32.f32 %v118
  %121 = vmin.xlane.f32.xlu0 %v120
  %v122 = vpop.xlane.xlu0 %121
  %vm123 = vcmp.eq.f32.partialorder %v120, %v122
  %v124 = vsel %vm123, %v119, inf
  %125 = vmin.xlane.f32.xlu0 %v124
  %v126 = vpop.xlane.xlu0 %125
  %v127 = vcvt.f32.s32 %v126
  %v128 = vcvt.f32.s32 %v122
  %v129 = vshll.u32 %v128, 16
  %v130 = vadd.s32 %v129, %v127
  %131 = vset.pattern.permute.xlu0 0
  %132 = vperm.xlu0 %131, %v86
  %v133 = vpop.permute.xlu0 %132
  %134 = vset.pattern.permute.xlu0 0
  %135 = vperm.xlu0 %134, %v87
  %v136 = vpop.permute.xlu0 %135
  %vm137 = vcmp.eq.s32.totalorder %v96, %v133
  %vm138 = vcmp.eq.s32.totalorder %v96, %v136
  %vm139 = vcmp.eq.s32.totalorder %v96, %v115
  %vm140 = vcmp.eq.s32.totalorder %v96, %v130
  %vm141 = vcmp.eq.s32.totalorder %v115, %v86
  %vm142 = vcmp.eq.s32.totalorder %v130, %v87
  %s143 = sadd.s32 0, 0
  %s144 = sadd.s32 %s143, 1
  %s145 = smul.u32 %s144, 16
  %p146 = scmp.le.s32.totalorder %s145, 16
  // Predicated region
  $region14: #{tpu_custom_call.1} parent=0 // pred_check
    %p147 = pneg %p146
  $region15: #{tpu_custom_call.1} parent=0 // pred_check_branch
    %149 = sbr.rel (%p147) target = $region17
  $region16: #{tpu_custom_call.1} parent=0 // pred_region
    %v150 = vld [vmem:[#allocation2] sm:$0x1]
    %v151 = vsel %vm137, 1, 0
    %v152 = vsel %vm138, 1, 0
    %v153 = vcvt.s32.f32 %v151
    %v154 = vcvt.s32.f32 %v152
    %v155 = vsel %vm88, %v153, 0.0
    %v156 = vsel %vm88, %v154, 0.0
    %v157 = vadd.f32 %v155, %v156
    %v158 = vrot.slane %v157, 4
    %v159 = vadd.f32 %v157, %v158
    %v160 = vrot.slane %v159, 2
    %v161 = vadd.f32 %v159, %v160
    %v162 = vrot.slane %v161, 1
    %v163 = vadd.f32 %v161, %v162
    %v164 = vadd.f32 %v150, %v163
    %vm165 = vcmask 57344
    %166 = vst.msk [vmem:[#allocation2] sm:$0x1] %vm165, %v164
    %v167 = vld [vmem:[#allocation3] sm:$0x1]
    %v168 = vsel %vm139, 1, 0
    %v169 = vsel %vm140, 1, 0
    %v170 = vcvt.s32.f32 %v168
    %v171 = vcvt.s32.f32 %v169
    %v172 = vsel %vm88, %v170, 0.0
    %v173 = vsel %vm88, %v171, 0.0
    %v174 = vadd.f32 %v172, %v173
    %v175 = vrot.slane %v174, 4
    %v176 = vadd.f32 %v174, %v175
    %v177 = vrot.slane %v176, 2
    %v178 = vadd.f32 %v176, %v177
    %v179 = vrot.slane %v178, 1
    %v180 = vadd.f32 %v178, %v179
    %v181 = vadd.f32 %v167, %v180
    %182 = vst.msk [vmem:[#allocation3] sm:$0x1] %vm165, %v181
    %v183 = vld [vmem:[#allocation4] sm:$0x1]
    %v184 = vsel %vm141, 1, 0
    %v185 = vsel %vm142, 1, 0
    %v186 = vcvt.s32.f32 %v184
    %v187 = vcvt.s32.f32 %v185
    %vm188 = vcmask 7168
    %v189 = vsel %vm188, %v186, 0.0
    %v190 = vsel %vm188, %v187, 0.0
    %v191 = vadd.f32 %v189, %v190
    %v192 = vrot.slane %v191, 4
    %v193 = vadd.f32 %v191, %v192
    %v194 = vrot.slane %v193, 2
    %v195 = vadd.f32 %v193, %v194
    %v196 = vrot.slane %v195, 1
    %v197 = vadd.f32 %v195, %v196
    %v198 = vadd.f32 %v183, %v197
    %vm199 = vcmask 0
    %200 = vst.msk [vmem:[#allocation4] sm:$0x1] %vm199, %v198
  $region17: #{tpu_custom_call.1} parent=0 // pred_fallthru
    _
  %p201 = scmp.gt.s32.totalorder %s145, 16
  // Predicated region
  $region18: #{tpu_custom_call.1} parent=0 // pred_check
    %p202 = pneg %p201
  $region19: #{tpu_custom_call.1} parent=0 // pred_check_branch
    %204 = sbr.rel (%p202) target = $region21
  $region20: #{tpu_custom_call.1} parent=0 // pred_region
    %v205 = vlaneseq
    %v206 = vshrl.u32 %v205, 7
    %v207 = vadd.s32 %v206, 8
    %s208 = smul.u32 %s143, 16
    %v209 = vstv %s208
    %v210 = vadd.s32 %v209, %v206
    %v211 = vadd.s32 %v209, %v207
    %vm212 = vcmp.lt.s32.totalorder %v210, 16
    %vm213 = vcmp.lt.s32.totalorder %v211, 16
    %v214 = vsel %vm212, 1, 0
    %v215 = vsel %vm213, 1, 0
    %vm216 = vcmp.eq.s32.totalorder %v214, 1
    %vm217 = vcmp.eq.s32.totalorder %v215, 1
    %vm218 = vmand %vm137, %vm216
    %vm219 = vmand %vm138, %vm217
    %vm220 = vmand %vm139, %vm216
    %vm221 = vmand %vm140, %vm217
    %vm222 = vmand %vm141, %vm212
    %vm223 = vmand %vm142, %vm213
    %v224 = vld [vmem:[#allocation2] sm:$0x1]
    %v225 = vsel %vm218, 1, 0
    %v226 = vsel %vm219, 1, 0
    %v227 = vcvt.s32.f32 %v225
    %v228 = vcvt.s32.f32 %v226
    %v229 = vsel %vm88, %v227, 0.0
    %v230 = vsel %vm88, %v228, 0.0
    %v231 = vadd.f32 %v229, %v230
    %v232 = vrot.slane %v231, 4
    %v233 = vadd.f32 %v231, %v232
    %v234 = vrot.slane %v233, 2
    %v235 = vadd.f32 %v233, %v234
    %v236 = vrot.slane %v235, 1
    %v237 = vadd.f32 %v235, %v236
    %v238 = vadd.f32 %v224, %v237
    %vm239 = vcmask 57344
    %240 = vst.msk [vmem:[#allocation2] sm:$0x1] %vm239, %v238
    %v241 = vld [vmem:[#allocation3] sm:$0x1]
    %v242 = vsel %vm220, 1, 0
    %v243 = vsel %vm221, 1, 0
    %v244 = vcvt.s32.f32 %v242
    %v245 = vcvt.s32.f32 %v243
    %v246 = vsel %vm88, %v244, 0.0
    %v247 = vsel %vm88, %v245, 0.0
    %v248 = vadd.f32 %v246, %v247
    %v249 = vrot.slane %v248, 4
    %v250 = vadd.f32 %v248, %v249
    %v251 = vrot.slane %v250, 2
    %v252 = vadd.f32 %v250, %v251
    %v253 = vrot.slane %v252, 1
    %v254 = vadd.f32 %v252, %v253
    %v255 = vadd.f32 %v241, %v254
    %256 = vst.msk [vmem:[#allocation3] sm:$0x1] %vm239, %v255
    %v257 = vld [vmem:[#allocation4] sm:$0x1]
    %v258 = vsel %vm222, 1, 0
    %v259 = vsel %vm223, 1, 0
    %v260 = vcvt.s32.f32 %v258
    %v261 = vcvt.s32.f32 %v259
    %vm262 = vcmask 7168
    %v263 = vsel %vm262, %v260, 0.0
    %v264 = vsel %vm262, %v261, 0.0
    %v265 = vadd.f32 %v263, %v264
    %v266 = vrot.slane %v265, 4
    %v267 = vadd.f32 %v265, %v266
    %v268 = vrot.slane %v267, 2
    %v269 = vadd.f32 %v267, %v268
    %v270 = vrot.slane %v269, 1
    %v271 = vadd.f32 %v269, %v270
    %v272 = vadd.f32 %v257, %v271
    %vm273 = vcmask 0
    %274 = vst.msk [vmem:[#allocation4] sm:$0x1] %vm273, %v272
  $region21: #{tpu_custom_call.1} parent=0 // pred_fallthru
    _
  // Predicated region
  $region22: #{tpu_custom_call.1} parent=0 // pred_check
    %p275 = pneg %p75
  $region23: #{tpu_custom_call.1} parent=0 // pred_check_branch
    %277 = sbr.rel (%p275) target = $region25
  $region24: #{tpu_custom_call.1} parent=0 // pred_region
    %v278 = vlaneseq
    %v279 = vshrl.u32 %v278, 7
    %vm280 = vcmp.eq.s32.totalorder %v279, 0
    %v281 = vld [vmem:[#allocation2] sm:$0x1]
    %vm282 = vcmp.eq.s32.totalorder %v279, 1
    %v283 = vld [vmem:[#allocation3] sm:$0x1]
    %v284 = vld [vmem:[#allocation4] sm:$0x1]
    %v286 = vlaneseq
    %v287 = vshrl.u32 %v286, 7
    %v288 = vsub.s32 0, %v287
    %v289 = vrot.slane %v283, %v288
    %v292 = vlaneseq
    %v293 = vshrl.u32 %v292, 7
    %v294 = vsub.s32 0, %v293
    %v295 = vrot.slane %v284, %v294
    %296 = vset.pattern.permute.xlu0 0
    %297 = vperm.xlu0 %296, %v295
    %v298 = vpop.permute.xlu0 %297
    %v300 = vsel %vm282, %v289, %v298
    %v302 = vlaneseq
    %v303 = vshrl.u32 %v302, 7
    %v304 = vsub.s32 0, %v303
    %v305 = vrot.slane %v281, %v304
    %v307 = vsel %vm280, %v305, %v300
    %vm308 = vcmask 59392
    %309 = vst.msk [vmem:[%s2] sm:$0x7] %vm308, %v307
  $region25: #{tpu_custom_call.1} parent=0 // pred_fallthru
    _
  // Predicated region
  $region26: #{tpu_custom_call.1} parent=0 // pred_check
    _
  $region27: #{tpu_custom_call.1} parent=0 // pred_check_branch
    %311 = sbr.rel (0) target = $region29
  $region28: #{tpu_custom_call.1} parent=0 // pred_region
    _
  $region29: #{tpu_custom_call.1} parent=0 // pred_fallthru
    _
  // Predicated region
  $region30: #{tpu_custom_call.1} parent=0 // pred_check
    _
  $region31: #{tpu_custom_call.1} parent=0 // pred_check_branch
    %313 = sbr.rel (0) target = $region33
  $region32: #{tpu_custom_call.1} parent=0 // pred_region
    _
  $region33: #{tpu_custom_call.1} parent=0 // pred_fallthru
    _

</llo_original>
